<compile_context>
chip_gen: v6e
topology: v6e:2x2x1
jax: 0.10.0
libtpu: 0.0.40
codegen_flags: <defaults>
</compile_context>

<pallas_src>
import functools

import jax
import jax.numpy as jnp
from jax.experimental import pallas as pl
from jax.experimental.pallas import tpu as pltpu

LANE = 128


def _round_up(x, m):
    return ((x + m - 1) // m) * m


def _sage_fused_kernel(a_ref, inv_deg_ref, h_ref, *rest, n_layers):
    """Fused n_layers x SAGEConv('mean') forward.

    rest = (w_self_0, w_neigh_0, b_0, ..., w_self_{L-1}, w_neigh_{L-1}, b_{L-1}, o_ref)

    a_ref       : (N, N)       bf16 0/1 adjacency (exact)
    inv_deg_ref : (N, 1)       f32  per-destination-row 1/deg (0 rows -> 0)
    h_ref       : (N, 128)     bf16 input node features (lane-padded)
    w_self_l    : (128, 128)   bf16 (zero-padded)
    w_neigh_l   : (128, 128)   bf16 (zero-padded)
    b_l         : (1, 128)     f32  (zero-padded)
    o_ref       : (N, 128)     f32  (lane-padded classifier logits)
    """
    o_ref = rest[-1]
    wb = rest[:-1]

    a = a_ref[...]              # adjacency, loaded once for all layers
    inv_deg = inv_deg_ref[...]  # f32 (N, 1), broadcast over lanes
    h = h_ref[...]
    out = None
    for l in range(n_layers):
        w_self = wb[3 * l][...]
        w_neigh = wb[3 * l + 1][...]
        bias = wb[3 * l + 2][...]
        # Exact mean aggregation: 0/1 A on the MXU (f32 accumulate), then scale
        # by the f32 1/deg on the VPU; single downcast to bf16 for the next MXU.
        h_neigh = (jnp.dot(a, h, preferred_element_type=jnp.float32)
                   * inv_deg).astype(h.dtype)
        # Self + neighbor projections: two lane-dense MXU dots summed in f32
        # (no lane-axis concat / relayout).
        out = (jnp.dot(h, w_self, preferred_element_type=jnp.float32)
               + jnp.dot(h_neigh, w_neigh, preferred_element_type=jnp.float32)
               + bias)
        if l != n_layers - 1:
            out = jnp.maximum(out, 0.0)      # ReLU on hidden layers
            h = out.astype(h_ref.dtype)      # bf16 for next layer's MXU
        # TODO(synk): nn.Dropout is identity in eval mode; training-mode
        # stochastic dropout (pltpu.prng_*) is not applied here.
    o_ref[...] = out.astype(o_ref.dtype)


def sage_forward(adj01, x, params):
    """Full SAGE forward fused into a single pallas_call.

    adj01 : (N, N) 0/1 adjacency (float). Mean aggregation uses exact f32 1/deg.
    params: list of (w_self, w_neigh, bias) per layer.
    """
    n, in_feats = x.shape
    n_layers = len(params)
    f_out_last = params[-1][0].shape[1]

    # Per-destination-row 1/deg in f32 (zero-degree rows -> 0, matching DGL).
    deg = jnp.sum(adj01, axis=1, keepdims=True)
    inv_deg = jnp.where(deg > 0, 1.0 / jnp.maximum(deg, 1.0), 0.0).astype(jnp.float32)

    # Lane-pad every feature dim to a multiple of 128 so all intermediates,
    # weights and the output store are lane-dense. Padding is zeros -> exact.
    f_in_pad = _round_up(in_feats, LANE)
    f_out_last_pad = _round_up(f_out_last, LANE)

    x_pad = jnp.pad(x, ((0, 0), (0, f_in_pad - in_feats)))
    operands = [adj01.astype(jnp.bfloat16), inv_deg, x_pad.astype(jnp.bfloat16)]
    for (w_self, w_neigh, bias) in params:
        f_in, f_out = w_self.shape
        fip, fop = _round_up(f_in, LANE), _round_up(f_out, LANE)
        pad2 = ((0, fip - f_in), (0, fop - f_out))
        operands += [
            jnp.pad(w_self, pad2).astype(jnp.bfloat16),
            jnp.pad(w_neigh, pad2).astype(jnp.bfloat16),
            jnp.pad(bias.reshape(1, -1), ((0, 0), (0, fop - f_out))).astype(jnp.float32),
        ]

    # Small problem: every operand fits comfortably in VMEM as a single
    # full-array block (no grid).
    # TODO(synk): for graph-scale N, add a grid over destination-node tiles
    # ("parallel" so v7x's 2 TensorCores are both used) with the source-node
    # (reduction) axis last ("arbitrary"), stream A row-tiles via BlockSpec so
    # the DMA overlaps compute, size the A block for v7x's 64 MiB VMEM, and
    # replace the dense N^2 adjacency with a scalar-prefetched CSR/gather form.
    in_specs = [pl.BlockSpec(op.shape, lambda: (0, 0)) for op in operands]
    out_spec = pl.BlockSpec((n, f_out_last_pad), lambda: (0, 0))

    kernel = functools.partial(_sage_fused_kernel, n_layers=n_layers)
    out_padded = pl.pallas_call(
        kernel,
        out_shape=jax.ShapeDtypeStruct((n, f_out_last_pad), jnp.float32),
        in_specs=in_specs,
        out_specs=out_spec,
        compiler_params=pltpu.CompilerParams(
            vmem_limit_bytes=32 * 1024 * 1024),
    )(*operands)
    # TODO(synk): emit bf16 output instead of f32 if downstream allows
    # (halves writeback bytes at graph-scale N).
    return out_padded[:, :f_out_last]


def init_params(key, in_feats, n_hidden, n_classes, n_layers):
    dims = [in_feats] + [n_hidden] * (n_layers - 1) + [n_classes]
    params = []
    for l in range(n_layers):
        f_in, f_out = dims[l], dims[l + 1]
        key, k1, k2 = jax.random.split(key, 3)
        scale = 1.0 / jnp.sqrt(jnp.float32(f_in))
        w_self = jax.random.uniform(k1, (f_in, f_out), jnp.float32, -scale, scale)
        w_neigh = jax.random.uniform(k2, (f_in, f_out), jnp.float32, -scale, scale)
        bias = jnp.zeros((f_out,), jnp.float32)
        params.append((w_self, w_neigh, bias))
    return params


if __name__ == "__main__":
    # Small deterministic problem.
    N = 64          # number of nodes
    in_feats = 32
    n_hidden = 32
    n_classes = 8
    n_layers = 3    # layers: in->hidden, hidden->hidden, hidden->classes

    key = jax.random.PRNGKey(0)
    key, k_adj, k_x, k_p = jax.random.split(key, 4)

    # Deterministic random graph -> dense 0/1 adjacency (no implicit self-loops;
    # zero-degree rows handled by inv_deg = 0, matching DGL 'mean').
    adj01 = (jax.random.uniform(k_adj, (N, N)) < 0.1).astype(jnp.float32)

    x = jax.random.normal(k_x, (N, in_feats), jnp.float32)
    params = init_params(k_p, in_feats, n_hidden, n_classes, n_layers)

    out = sage_forward(adj01, x, params)
    out = jax.block_until_ready(out)
    assert out.shape == (N, n_classes)

    # Plain-JAX reference with matching precision choices
    # (0/1 bf16 A, f32 1/deg, bf16 MXU inputs, f32 accumulation).
    a_bf = adj01.astype(jnp.bfloat16)
    deg = jnp.sum(adj01, axis=1, keepdims=True)
    inv_deg = jnp.where(deg > 0, 1.0 / jnp.maximum(deg, 1.0), 0.0).astype(jnp.float32)
    h = x.astype(jnp.bfloat16)
    ref = None
    for l, (w_self, w_neigh, bias) in enumerate(params):
        hn = (jnp.dot(a_bf, h, preferred_element_type=jnp.float32)
              * inv_deg).astype(jnp.bfloat16)
        ref = (jnp.dot(h, w_self.astype(jnp.bfloat16),
                       preferred_element_type=jnp.float32)
               + jnp.dot(hn, w_neigh.astype(jnp.bfloat16),
                         preferred_element_type=jnp.float32)
               + bias)
        if l != n_layers - 1:
            ref = jnp.maximum(ref, 0.0)
            h = ref.astype(jnp.bfloat16)

    max_err = float(jnp.max(jnp.abs(out - ref)))
    assert jnp.allclose(out, ref, atol=1e-2, rtol=1e-2), max_err

    print("KERNEL_OK")
</pallas_src>

<mosaic_0001>
module attributes {stable_mosaic.version = 11 : i64} {
  func.func @_sage_fused_kernel(%arg0: memref<64x64xbf16, #tpu.memory_space<vmem>>, %arg1: memref<64x1xf32, #tpu.memory_space<vmem>>, %arg2: memref<64x128xbf16, #tpu.memory_space<vmem>>, %arg3: memref<128x128xbf16, #tpu.memory_space<vmem>>, %arg4: memref<128x128xbf16, #tpu.memory_space<vmem>>, %arg5: memref<1x128xf32, #tpu.memory_space<vmem>>, %arg6: memref<128x128xbf16, #tpu.memory_space<vmem>>, %arg7: memref<128x128xbf16, #tpu.memory_space<vmem>>, %arg8: memref<1x128xf32, #tpu.memory_space<vmem>>, %arg9: memref<128x128xbf16, #tpu.memory_space<vmem>>, %arg10: memref<128x128xbf16, #tpu.memory_space<vmem>>, %arg11: memref<1x128xf32, #tpu.memory_space<vmem>>, %arg12: memref<64x128xf32, #tpu.memory_space<vmem>>) attributes {dimension_semantics = [], scalar_prefetch = 0 : i64, scratch_operands = 0 : i64, tpu.core_type = #tpu.core_type<tc>} {
    %c0 = arith.constant 0 : index
    %c0_0 = arith.constant 0 : index
    %0 = vector.load %arg0[%c0, %c0_0] : memref<64x64xbf16, #tpu.memory_space<vmem>>, vector<64x64xbf16>
    %c0_1 = arith.constant 0 : index
    %c0_2 = arith.constant 0 : index
    %1 = vector.load %arg1[%c0_1, %c0_2] : memref<64x1xf32, #tpu.memory_space<vmem>>, vector<64x1xf32>
    %c0_3 = arith.constant 0 : index
    %c0_4 = arith.constant 0 : index
    %2 = vector.load %arg2[%c0_3, %c0_4] : memref<64x128xbf16, #tpu.memory_space<vmem>>, vector<64x128xbf16>
    %c0_5 = arith.constant 0 : index
    %c0_6 = arith.constant 0 : index
    %3 = vector.load %arg3[%c0_5, %c0_6] : memref<128x128xbf16, #tpu.memory_space<vmem>>, vector<128x128xbf16>
    %c0_7 = arith.constant 0 : index
    %c0_8 = arith.constant 0 : index
    %4 = vector.load %arg4[%c0_7, %c0_8] : memref<128x128xbf16, #tpu.memory_space<vmem>>, vector<128x128xbf16>
    %c0_9 = arith.constant 0 : index
    %c0_10 = arith.constant 0 : index
    %5 = vector.load %arg5[%c0_9, %c0_10] : memref<1x128xf32, #tpu.memory_space<vmem>>, vector<1x128xf32>
    %cst = arith.constant dense<0.000000e+00> : vector<64x128xf32>
    %6 = tpu.matmul %0, %2, %cst {dimension_numbers = #tpu.dot_dimension_numbers<[1], [0], [0], [1], [0, 0, 1, 1], [], []>} : vector<64x64xbf16>, vector<64x128xbf16>, vector<64x128xf32> -> vector<64x128xf32>
    %7 = vector.broadcast %1 : vector<64x1xf32> to vector<64x128xf32>
    %8 = arith.mulf %6, %7 : vector<64x128xf32>
    %9 = arith.truncf %8 : vector<64x128xf32> to vector<64x128xbf16>
    %cst_11 = arith.constant dense<0.000000e+00> : vector<64x128xf32>
    %10 = tpu.matmul %2, %3, %cst_11 {dimension_numbers = #tpu.dot_dimension_numbers<[1], [0], [0], [1], [0, 0, 1, 1], [], []>} : vector<64x128xbf16>, vector<128x128xbf16>, vector<64x128xf32> -> vector<64x128xf32>
    %cst_12 = arith.constant dense<0.000000e+00> : vector<64x128xf32>
    %11 = tpu.matmul %9, %4, %cst_12 {dimension_numbers = #tpu.dot_dimension_numbers<[1], [0], [0], [1], [0, 0, 1, 1], [], []>} : vector<64x128xbf16>, vector<128x128xbf16>, vector<64x128xf32> -> vector<64x128xf32>
    %12 = arith.addf %10, %11 : vector<64x128xf32>
    %13 = vector.broadcast %5 : vector<1x128xf32> to vector<64x128xf32>
    %14 = arith.addf %12, %13 : vector<64x128xf32>
    %cst_13 = arith.constant 0.000000e+00 : f32
    %15 = vector.broadcast %cst_13 : f32 to vector<64x128xf32>
    %16 = arith.maximumf %14, %15 : vector<64x128xf32>
    %17 = arith.truncf %16 : vector<64x128xf32> to vector<64x128xbf16>
    %c0_14 = arith.constant 0 : index
    %c0_15 = arith.constant 0 : index
    %18 = vector.load %arg6[%c0_14, %c0_15] : memref<128x128xbf16, #tpu.memory_space<vmem>>, vector<128x128xbf16>
    %c0_16 = arith.constant 0 : index
    %c0_17 = arith.constant 0 : index
    %19 = vector.load %arg7[%c0_16, %c0_17] : memref<128x128xbf16, #tpu.memory_space<vmem>>, vector<128x128xbf16>
    %c0_18 = arith.constant 0 : index
    %c0_19 = arith.constant 0 : index
    %20 = vector.load %arg8[%c0_18, %c0_19] : memref<1x128xf32, #tpu.memory_space<vmem>>, vector<1x128xf32>
    %cst_20 = arith.constant dense<0.000000e+00> : vector<64x128xf32>
    %21 = tpu.matmul %0, %17, %cst_20 {dimension_numbers = #tpu.dot_dimension_numbers<[1], [0], [0], [1], [0, 0, 1, 1], [], []>} : vector<64x64xbf16>, vector<64x128xbf16>, vector<64x128xf32> -> vector<64x128xf32>
    %22 = vector.broadcast %1 : vector<64x1xf32> to vector<64x128xf32>
    %23 = arith.mulf %21, %22 : vector<64x128xf32>
    %24 = arith.truncf %23 : vector<64x128xf32> to vector<64x128xbf16>
    %cst_21 = arith.constant dense<0.000000e+00> : vector<64x128xf32>
    %25 = tpu.matmul %17, %18, %cst_21 {dimension_numbers = #tpu.dot_dimension_numbers<[1], [0], [0], [1], [0, 0, 1, 1], [], []>} : vector<64x128xbf16>, vector<128x128xbf16>, vector<64x128xf32> -> vector<64x128xf32>
    %cst_22 = arith.constant dense<0.000000e+00> : vector<64x128xf32>
    %26 = tpu.matmul %24, %19, %cst_22 {dimension_numbers = #tpu.dot_dimension_numbers<[1], [0], [0], [1], [0, 0, 1, 1], [], []>} : vector<64x128xbf16>, vector<128x128xbf16>, vector<64x128xf32> -> vector<64x128xf32>
    %27 = arith.addf %25, %26 : vector<64x128xf32>
    %28 = vector.broadcast %20 : vector<1x128xf32> to vector<64x128xf32>
    %29 = arith.addf %27, %28 : vector<64x128xf32>
    %cst_23 = arith.constant 0.000000e+00 : f32
    %30 = vector.broadcast %cst_23 : f32 to vector<64x128xf32>
    %31 = arith.maximumf %29, %30 : vector<64x128xf32>
    %32 = arith.truncf %31 : vector<64x128xf32> to vector<64x128xbf16>
    %c0_24 = arith.constant 0 : index
    %c0_25 = arith.constant 0 : index
    %33 = vector.load %arg9[%c0_24, %c0_25] : memref<128x128xbf16, #tpu.memory_space<vmem>>, vector<128x128xbf16>
    %c0_26 = arith.constant 0 : index
    %c0_27 = arith.constant 0 : index
    %34 = vector.load %arg10[%c0_26, %c0_27] : memref<128x128xbf16, #tpu.memory_space<vmem>>, vector<128x128xbf16>
    %c0_28 = arith.constant 0 : index
    %c0_29 = arith.constant 0 : index
    %35 = vector.load %arg11[%c0_28, %c0_29] : memref<1x128xf32, #tpu.memory_space<vmem>>, vector<1x128xf32>
    %cst_30 = arith.constant dense<0.000000e+00> : vector<64x128xf32>
    %36 = tpu.matmul %0, %32, %cst_30 {dimension_numbers = #tpu.dot_dimension_numbers<[1], [0], [0], [1], [0, 0, 1, 1], [], []>} : vector<64x64xbf16>, vector<64x128xbf16>, vector<64x128xf32> -> vector<64x128xf32>
    %37 = vector.broadcast %1 : vector<64x1xf32> to vector<64x128xf32>
    %38 = arith.mulf %36, %37 : vector<64x128xf32>
    %39 = arith.truncf %38 : vector<64x128xf32> to vector<64x128xbf16>
    %cst_31 = arith.constant dense<0.000000e+00> : vector<64x128xf32>
    %40 = tpu.matmul %32, %33, %cst_31 {dimension_numbers = #tpu.dot_dimension_numbers<[1], [0], [0], [1], [0, 0, 1, 1], [], []>} : vector<64x128xbf16>, vector<128x128xbf16>, vector<64x128xf32> -> vector<64x128xf32>
    %cst_32 = arith.constant dense<0.000000e+00> : vector<64x128xf32>
    %41 = tpu.matmul %39, %34, %cst_32 {dimension_numbers = #tpu.dot_dimension_numbers<[1], [0], [0], [1], [0, 0, 1, 1], [], []>} : vector<64x128xbf16>, vector<128x128xbf16>, vector<64x128xf32> -> vector<64x128xf32>
    %42 = arith.addf %40, %41 : vector<64x128xf32>
    %43 = vector.broadcast %35 : vector<1x128xf32> to vector<64x128xf32>
    %44 = arith.addf %42, %43 : vector<64x128xf32>
    %c0_33 = arith.constant 0 : index
    %c0_34 = arith.constant 0 : index
    %45 = vector.load %arg12[%c0_33, %c0_34] : memref<64x128xf32, #tpu.memory_space<vmem>>, vector<64x128xf32>
    tpu.vector_store %arg12[%c0_33, %c0_34], %44 {strides = array<i32>} : memref<64x128xf32, #tpu.memory_space<vmem>>, vector<64x128xf32>,
    return
  }
}

</mosaic_0001>

<llo_original>
// kernel: tpu_custom_call.1
$region0: #{tpu_custom_call.1}
  #allocation0 [shape = 'u32[]', space=smem, size = 0x4, offset = 0x4, fixed_abs, tag = 'smem constant byte address 0x4 - core index']
  #allocation1 [shape = 'u32[144,128]{1,0:T(1,128)}', space=vmem, size = 0x12000, scoped, tag = 'internal scratch']
  %s0 = inlined_call_operand.hbm [shape: bf16[64,64], index: 0, kind: input, shape index: {}]
  %s1 = inlined_call_operand.vmem [shape: f32[64,1], index: 1, kind: input, shape index: {}]
  %s2 = inlined_call_operand.hbm [shape: bf16[64,128], index: 2, kind: input, shape index: {}]
  %s3 = inlined_call_operand.vmem [shape: bf16[128,128], index: 3, kind: input, shape index: {}]
  %s4 = inlined_call_operand.hbm [shape: bf16[128,128], index: 4, kind: input, shape index: {}]
  %s5 = inlined_call_operand.vmem [shape: f32[1,128], index: 5, kind: input, shape index: {}]
  %s6 = inlined_call_operand.hbm [shape: bf16[128,128], index: 6, kind: input, shape index: {}]
  %s7 = inlined_call_operand.hbm [shape: bf16[128,128], index: 7, kind: input, shape index: {}]
  %s8 = inlined_call_operand.vmem [shape: f32[1,128], index: 8, kind: input, shape index: {}]
  %s9 = inlined_call_operand.hbm [shape: bf16[128,128], index: 9, kind: input, shape index: {}]
  %s10 = inlined_call_operand.hbm [shape: bf16[128,128], index: 10, kind: input, shape index: {}]
  %s11 = inlined_call_operand.vmem [shape: f32[1,128], index: 11, kind: input, shape index: {}]
  %s12 = inlined_call_operand.hbm [shape: f32[64,128], index: 12, kind: output, shape index: {}]
  %s13 = sld [smem:[#allocation0]]
  $region86: #{tpu_custom_call.1} parent=0
    _
  %s15 = ssub.s32 1, %s13
  %s16 = scalar_select 0, %s15, %s13
  $region1: #{tpu_custom_call.1} parent=0
    #allocation2 [shape = 'u8[16384]{0}', space=vmem, size = 0x4000, scoped, tag = 'input window, operand 0, single buffered']
    #allocation3 [shape = 's32[1]{0}', space=sflag, size = 0x4, scoped, tag = 'scoped memory for tpu_custom_call.1']
    #allocation4 [shape = 's32[1]{0}', space=sflag, size = 0x4, scoped, tag = 'scoped memory for tpu_custom_call.1']
    #allocation5 [shape = 'u8[16384]{0}', space=vmem, size = 0x4000, scoped, tag = 'input window, operand 2, single buffered']
    #allocation6 [shape = 's32[1]{0}', space=sflag, size = 0x4, scoped, tag = 'scoped memory for tpu_custom_call.1']
    #allocation7 [shape = 'u8[32768]{0}', space=vmem, size = 0x8000, scoped, tag = 'input window, operand 4, single buffered']
    #allocation8 [shape = 'u8[32768]{0}', space=vmem, size = 0x8000, scoped, tag = 'input window, operand 6, single buffered']
    #allocation9 [shape = 's32[1]{0}', space=sflag, size = 0x4, scoped, tag = 'scoped memory for tpu_custom_call.1']
    #allocation10 [shape = 'u8[32768]{0}', space=vmem, size = 0x8000, scoped, tag = 'input window, operand 7, single buffered']
    #allocation11 [shape = 'u8[32768]{0}', space=vmem, size = 0x8000, scoped, tag = 'input window, operand 9, single buffered']
    #allocation12 [shape = 's32[1]{0}', space=sflag, size = 0x4, scoped, tag = 'scoped memory for tpu_custom_call.1']
    #allocation13 [shape = 'u8[32768]{0}', space=vmem, size = 0x8000, scoped, tag = 'input window, operand 10, single buffered']
    #allocation14 [shape = 'u8[32768]{0}', space=vmem, size = 0x8000, scoped, tag = 'output window, operand 0, single buffered']
    %17 = vsyncpa [#allocation3], 0
    %18 = vsyncpa [#allocation6], 0
    %19 = vsyncpa [#allocation9], 0
    %20 = vsyncpa [#allocation12], 0
    %21 = vsyncpa [#allocation4], 0
    // Predicated region
    $region2: #{tpu_custom_call.1} parent=1 // pred_check
      _
    $region3: #{tpu_custom_call.1} parent=1 // pred_check_branch
      %23 = sbr.rel (0) target = $region5
    $region4: #{tpu_custom_call.1} parent=1 // pred_region
      %s25 = ssub.s32 512, 512
      %26 = vsyncadd [#allocation3], %s25
      %s27 = sshll.u32 [#allocation2], 4
      %s28 = int_to_ptr.vmem [resolvable:$true] %s27
      %33 = dma.hbm_to_vmem [thread:$0]  %s0, 512, %s28, [#allocation3], 64, 64, 4
    $region5: #{tpu_custom_call.1} parent=1 // pred_fallthru
      _
    // Predicated region
    $region6: #{tpu_custom_call.1} parent=1 // pred_check
      _
    $region7: #{tpu_custom_call.1} parent=1 // pred_check_branch
      %35 = sbr.rel (0) target = $region9
    $region8: #{tpu_custom_call.1} parent=1 // pred_region
      _
    $region9: #{tpu_custom_call.1} parent=1 // pred_fallthru
      _
    // Predicated region
    $region10: #{tpu_custom_call.1} parent=1 // pred_check
      _
    $region11: #{tpu_custom_call.1} parent=1 // pred_check_branch
      %37 = sbr.rel (0) target = $region13
    $region12: #{tpu_custom_call.1} parent=1 // pred_region
      %s39 = ssub.s32 512, 512
      %40 = vsyncadd [#allocation6], %s39
      %s41 = sshll.u32 [#allocation5], 4
      %s42 = int_to_ptr.vmem [resolvable:$true] %s41
      %47 = dma.hbm_to_vmem [thread:$0]  %s2, 512, %s42, [#allocation6], 64, 64, 4
    $region13: #{tpu_custom_call.1} parent=1 // pred_fallthru
      _
    // Predicated region
    $region14: #{tpu_custom_call.1} parent=1 // pred_check
      _
    $region15: #{tpu_custom_call.1} parent=1 // pred_check_branch
      %49 = sbr.rel (0) target = $region17
    $region16: #{tpu_custom_call.1} parent=1 // pred_region
      _
    $region17: #{tpu_custom_call.1} parent=1 // pred_fallthru
      _
    // Predicated region
    $region18: #{tpu_custom_call.1} parent=1 // pred_check
      _
    $region19: #{tpu_custom_call.1} parent=1 // pred_check_branch
      %51 = sbr.rel (0) target = $region21
    $region20: #{tpu_custom_call.1} parent=1 // pred_region
      %s53 = ssub.s32 1024, 1024
      %54 = vsyncadd [#allocation6], %s53
      %s55 = sshll.u32 [#allocation7], 4
      %s56 = int_to_ptr.vmem [resolvable:$true] %s55
      %61 = dma.hbm_to_vmem [thread:$0]  %s4, 1024, %s56, [#allocation6], 64, 64, 4
    $region21: #{tpu_custom_call.1} parent=1 // pred_fallthru
      _
    // Predicated region
    $region22: #{tpu_custom_call.1} parent=1 // pred_check
      _
    $region23: #{tpu_custom_call.1} parent=1 // pred_check_branch
      %63 = sbr.rel (0) target = $region25
    $region24: #{tpu_custom_call.1} parent=1 // pred_region
      _
    $region25: #{tpu_custom_call.1} parent=1 // pred_fallthru
      _
    // Predicated region
    $region26: #{tpu_custom_call.1} parent=1 // pred_check
      _
    $region27: #{tpu_custom_call.1} parent=1 // pred_check_branch
      %65 = sbr.rel (0) target = $region29
    $region28: #{tpu_custom_call.1} parent=1 // pred_region
      %s67 = ssub.s32 1024, 1024
      %68 = vsyncadd [#allocation9], %s67
      %s69 = sshll.u32 [#allocation8], 4
      %s70 = int_to_ptr.vmem [resolvable:$true] %s69
      %75 = dma.hbm_to_vmem [thread:$0]  %s6, 1024, %s70, [#allocation9], 64, 64, 4
    $region29: #{tpu_custom_call.1} parent=1 // pred_fallthru
      _
    // Predicated region
    $region30: #{tpu_custom_call.1} parent=1 // pred_check
      _
    $region31: #{tpu_custom_call.1} parent=1 // pred_check_branch
      %77 = sbr.rel (0) target = $region33
    $region32: #{tpu_custom_call.1} parent=1 // pred_region
      %s79 = ssub.s32 1024, 1024
      %80 = vsyncadd [#allocation9], %s79
      %s81 = sshll.u32 [#allocation10], 4
      %s82 = int_to_ptr.vmem [resolvable:$true] %s81
      %87 = dma.hbm_to_vmem [thread:$0]  %s7, 1024, %s82, [#allocation9], 64, 64, 4
    $region33: #{tpu_custom_call.1} parent=1 // pred_fallthru
      _
    // Predicated region
    $region34: #{tpu_custom_call.1} parent=1 // pred_check
      _
    $region35: #{tpu_custom_call.1} parent=1 // pred_check_branch
      %89 = sbr.rel (0) target = $region37
    $region36: #{tpu_custom_call.1} parent=1 // pred_region
      _
    $region37: #{tpu_custom_call.1} parent=1 // pred_fallthru
      _
    // Predicated region
    $region38: #{tpu_custom_call.1} parent=1 // pred_check
      _
    $region39: #{tpu_custom_call.1} parent=1 // pred_check_branch
      %91 = sbr.rel (0) target = $region41
    $region40: #{tpu_custom_call.1} parent=1 // pred_region
      %s93 = ssub.s32 1024, 1024
      %94 = vsyncadd [#allocation12], %s93
      %s95 = sshll.u32 [#allocation11], 4
      %s96 = int_to_ptr.vmem [resolvable:$true] %s95
      %101 = dma.hbm_to_vmem [thread:$0]  %s9, 1024, %s96, [#allocation12], 64, 64, 4
    $region41: #{tpu_custom_call.1} parent=1 // pred_fallthru
      _
    // Predicated region
    $region42: #{tpu_custom_call.1} parent=1 // pred_check
      _
    $region43: #{tpu_custom_call.1} parent=1 // pred_check_branch
      %103 = sbr.rel (0) target = $region45
    $region44: #{tpu_custom_call.1} parent=1 // pred_region
      %s105 = ssub.s32 1024, 1024
      %106 = vsyncadd [#allocation12], %s105
      %s107 = sshll.u32 [#allocation13], 4
      %s108 = int_to_ptr.vmem [resolvable:$true] %s107
      %113 = dma.hbm_to_vmem [thread:$0]  %s10, 1024, %s108, [#allocation12], 64, 64, 4
    $region45: #{tpu_custom_call.1} parent=1 // pred_fallthru
      _
    // Predicated region
    $region46: #{tpu_custom_call.1} parent=1 // pred_check
      _
    $region47: #{tpu_custom_call.1} parent=1 // pred_check_branch
      %115 = sbr.rel (0) target = $region49
    $region48: #{tpu_custom_call.1} parent=1 // pred_region
      _
    $region49: #{tpu_custom_call.1} parent=1 // pred_fallthru
      _
    // Predicated region
    $region50: #{tpu_custom_call.1} parent=1 // pred_check
      _
    $region51: #{tpu_custom_call.1} parent=1 // pred_check_branch
      %117 = sbr.rel (0) target = $region53
    $region52: #{tpu_custom_call.1} parent=1 // pred_region
      %118 = dma.done [#allocation3], 512
    $region53: #{tpu_custom_call.1} parent=1 // pred_fallthru
      _
    // Predicated region
    $region54: #{tpu_custom_call.1} parent=1 // pred_check
      _
    $region55: #{tpu_custom_call.1} parent=1 // pred_check_branch
      %120 = sbr.rel (0) target = $region57
    $region56: #{tpu_custom_call.1} parent=1 // pred_region
      %121 = dma.done [#allocation6], 512
    $region57: #{tpu_custom_call.1} parent=1 // pred_fallthru
      _
    // Predicated region
    $region58: #{tpu_custom_call.1} parent=1 // pred_check
      _
    $region59: #{tpu_custom_call.1} parent=1 // pred_check_branch
      %123 = sbr.rel (0) target = $region61
    $region60: #{tpu_custom_call.1} parent=1 // pred_region
      %124 = dma.done [#allocation6], 1024
    $region61: #{tpu_custom_call.1} parent=1 // pred_fallthru
      _
    // Predicated region
    $region62: #{tpu_custom_call.1} parent=1 // pred_check
      _
    $region63: #{tpu_custom_call.1} parent=1 // pred_check_branch
      %126 = sbr.rel (0) target = $region65
    $region64: #{tpu_custom_call.1} parent=1 // pred_region
      %127 = dma.done [#allocation9], 1024
    $region65: #{tpu_custom_call.1} parent=1 // pred_fallthru
      _
    // Predicated region
    $region66: #{tpu_custom_call.1} parent=1 // pred_check
      _
    $region67: #{tpu_custom_call.1} parent=1 // pred_check_branch
      %129 = sbr.rel (0) target = $region69
    $region68: #{tpu_custom_call.1} parent=1 // pred_region
      %130 = dma.done [#allocation9], 1024
    $region69: #{tpu_custom_call.1} parent=1 // pred_fallthru
      _
    // Predicated region
    $region70: #{tpu_custom_call.1} parent=1 // pred_check
      _
    $region71: #{tpu_custom_call.1} parent=1 // pred_check_branch
      %132 = sbr.rel (0) target = $region73
    $region72: #{tpu_custom_call.1} parent=1 // pred_region
      %133 = dma.done [#allocation12], 1024
    $region73: #{tpu_custom_call.1} parent=1 // pred_fallthru
      _
    // Predicated region
    $region74: #{tpu_custom_call.1} parent=1 // pred_check
      _
    $region75: #{tpu_custom_call.1} parent=1 // pred_check_branch
      %135 = sbr.rel (0) target = $region77
    $region76: #{tpu_custom_call.1} parent=1 // pred_region
      %136 = dma.done [#allocation12], 1024
    $region77: #{tpu_custom_call.1} parent=1 // pred_fallthru
      _
    %v138 = vld [vmem:[#allocation2] sm:$0xf]
    %v139 = vld [vmem:[#allocation2 + $0x4] sm:$0xf]
    %v140 = vld [vmem:[#allocation2 + $0x8] sm:$0xf]
    %v141 = vld [vmem:[#allocation2 + $0xc] sm:$0xf]
    %v142 = vld [vmem:[#allocation2 + $0x10] sm:$0xf]
    %v143 = vld [vmem:[#allocation2 + $0x14] sm:$0xf]
    %v144 = vld [vmem:[#allocation2 + $0x18] sm:$0xf]
    %v145 = vld [vmem:[#allocation2 + $0x1c] sm:$0xf]
    %v146 = vld [vmem:[%s1] sm:$0xff]
    %v147 = vld [vmem:[%s1 + $0x8] sm:$0xff]
    %v148 = vld [vmem:[%s1 + $0x10] sm:$0xff]
    %v149 = vld [vmem:[%s1 + $0x18] sm:$0xff]
    %v150 = vld [vmem:[%s1 + $0x20] sm:$0xff]
    %v151 = vld [vmem:[%s1 + $0x28] sm:$0xff]
    %v152 = vld [vmem:[%s1 + $0x30] sm:$0xff]
    %v153 = vld [vmem:[%s1 + $0x38] sm:$0xff]
    %v154 = vld [vmem:[#allocation5] sm:$0xf]
    %v155 = vld [vmem:[#allocation5 + $0x4] sm:$0xf]
    %v156 = vld [vmem:[#allocation5 + $0x8] sm:$0xf]
    %v157 = vld [vmem:[#allocation5 + $0xc] sm:$0xf]
    %v158 = vld [vmem:[#allocation5 + $0x10] sm:$0xf]
    %v159 = vld [vmem:[#allocation5 + $0x14] sm:$0xf]
    %v160 = vld [vmem:[#allocation5 + $0x18] sm:$0xf]
    %v161 = vld [vmem:[#allocation5 + $0x1c] sm:$0xf]
    %v162 = vld [vmem:[%s3] sm:$0xf]
    %v163 = vld [vmem:[%s3 + $0x4] sm:$0xf]
    %v164 = vld [vmem:[%s3 + $0x8] sm:$0xf]
    %v165 = vld [vmem:[%s3 + $0xc] sm:$0xf]
    %v166 = vld [vmem:[%s3 + $0x10] sm:$0xf]
    %v167 = vld [vmem:[%s3 + $0x14] sm:$0xf]
    %v168 = vld [vmem:[%s3 + $0x18] sm:$0xf]
    %v169 = vld [vmem:[%s3 + $0x1c] sm:$0xf]
    %v170 = vld [vmem:[%s3 + $0x20] sm:$0xf]
    %v171 = vld [vmem:[%s3 + $0x24] sm:$0xf]
    %v172 = vld [vmem:[%s3 + $0x28] sm:$0xf]
    %v173 = vld [vmem:[%s3 + $0x2c] sm:$0xf]
    %v174 = vld [vmem:[%s3 + $0x30] sm:$0xf]
    %v175 = vld [vmem:[%s3 + $0x34] sm:$0xf]
    %v176 = vld [vmem:[%s3 + $0x38] sm:$0xf]
    %v177 = vld [vmem:[%s3 + $0x3c] sm:$0xf]
    %v178 = vld [vmem:[#allocation7] sm:$0xf]
    %v179 = vld [vmem:[#allocation7 + $0x4] sm:$0xf]
    %v180 = vld [vmem:[#allocation7 + $0x8] sm:$0xf]
    %v181 = vld [vmem:[#allocation7 + $0xc] sm:$0xf]
    %v182 = vld [vmem:[#allocation7 + $0x10] sm:$0xf]
    %v183 = vld [vmem:[#allocation7 + $0x14] sm:$0xf]
    %v184 = vld [vmem:[#allocation7 + $0x18] sm:$0xf]
    %v185 = vld [vmem:[#allocation7 + $0x1c] sm:$0xf]
    %v186 = vld [vmem:[#allocation7 + $0x20] sm:$0xf]
    %v187 = vld [vmem:[#allocation7 + $0x24] sm:$0xf]
    %v188 = vld [vmem:[#allocation7 + $0x28] sm:$0xf]
    %v189 = vld [vmem:[#allocation7 + $0x2c] sm:$0xf]
    %v190 = vld [vmem:[#allocation7 + $0x30] sm:$0xf]
    %v191 = vld [vmem:[#allocation7 + $0x34] sm:$0xf]
    %v192 = vld [vmem:[#allocation7 + $0x38] sm:$0xf]
    %v193 = vld [vmem:[#allocation7 + $0x3c] sm:$0xf]
    %v194 = vld [vmem:[%s5] sm:$0x1]
    %v203 = vunpack.c.l.b16 %v138
    %v204 = vunpack.c.l.b16 %v139
    %v205 = vunpack.c.l.b16 %v140
    %v206 = vunpack.c.l.b16 %v141
    %v207 = vunpack.c.l.b16 %v142
    %v208 = vunpack.c.l.b16 %v143
    %v209 = vunpack.c.l.b16 %v144
    %v210 = vunpack.c.l.b16 %v145
    %v211 = vpack.c.b16 %v204, %v203
    %v212 = vpack.c.b16 %v206, %v205
    %v213 = vpack.c.b16 %v208, %v207
    %v214 = vpack.c.b16 %v210, %v209
    %v223 = vunpack.c.l.b16 %v154
    %v224 = vunpack.c.l.b16 %v155
    %v225 = vunpack.c.l.b16 %v156
    %v226 = vunpack.c.l.b16 %v157
    %v227 = vunpack.c.l.b16 %v158
    %v228 = vunpack.c.l.b16 %v159
    %v229 = vunpack.c.l.b16 %v160
    %v230 = vunpack.c.l.b16 %v161
    %v231 = vpack.c.b16 %v224, %v223
    %v232 = vpack.c.b16 %v226, %v225
    %v233 = vpack.c.b16 %v228, %v227
    %v234 = vpack.c.b16 %v230, %v229
    %vm239 = vcmask 523264
    %v241 = vsel %vm239, %v211, 0
    %v244 = vsel %vm239, %v212, 0
    %v247 = vsel %vm239, %v213, 0
    %v250 = vsel %vm239, %v214, 0
    %252 = vmatprep.subr.bf16.mxu0 0
    %253 = vmatpush1.bf16.msra.mxu0 0
    %254 = vmatprep.subr.bf16.mxu0 0
    %255 = vmatpush1.bf16.msra.mxu0 0
    %256 = vmatprep.subr.bf16.mxu0 0
    %257 = vmatpush1.bf16.msra.mxu0 0
    %258 = vmatprep.subr.bf16.mxu0 0
    %259 = vmatpush1.bf16.msra.mxu0 0
    %260 = vmatprep.subr.bf16.mxu0 0
    %261 = vmatpush1.bf16.msra.mxu0 %v234
    %262 = vmatprep.subr.bf16.mxu0 0
    %263 = vmatpush1.bf16.msra.mxu0 %v233
    %264 = vmatprep.subr.bf16.mxu0 0
    %265 = vmatpush1.bf16.msra.mxu0 %v232
    %266 = vmatprep.subr.bf16.mxu0 0
    %267 = vmatpush1.bf16.msra.mxu0 %v231
    %268 = vmatprep.subr.bf16.mxu0 0
    %269 = vmatpush2.bf16.msra.mxu0 0
    %270 = vmatprep.subr.bf16.mxu0 0
    %271 = vmatpush2.bf16.msra.mxu0 0
    %272 = vmatprep.subr.bf16.mxu0 0
    %273 = vmatpush2.bf16.msra.mxu0 0
    %274 = vmatprep.subr.bf16.mxu0 0
    %275 = vmatpush2.bf16.msra.mxu0 0
    %276 = vmatprep.subr.bf16.mxu0 0
    %277 = vmatpush2.bf16.msra.mxu0 0
    %278 = vmatprep.subr.bf16.mxu0 0
    %279 = vmatpush2.bf16.msra.mxu0 0
    %280 = vmatprep.subr.bf16.mxu0 0
    %281 = vmatpush2.bf16.msra.mxu0 0
    %282 = vmatprep.subr.bf16.mxu0 0
    %283 = vmatpush2.bf16.msra.mxu0 0
    %284 = vmatprep.mubr.bf16.mxu0 0
    %285 = vmatmul.mubr.bf16.gmra.mxu0 %v241
    %v286 = vpop.f32.mrf.mxu0
    %v287 = vadd.f32 0.0, %v286
    %v288 = vpop.f32.mrf.mxu0
    %v289 = vpop.f32.mrf.mxu0
    %v290 = vadd.f32 0.0, %v289
    %v291 = vpop.f32.mrf.mxu0
    %292 = vmatprep.mubr.bf16.mxu0 0
    %293 = vmatmul.mubr.bf16.gmra.mxu0 %v244
    %v294 = vpop.f32.mrf.mxu0
    %v295 = vadd.f32 0.0, %v294
    %v296 = vpop.f32.mrf.mxu0
    %v297 = vpop.f32.mrf.mxu0
    %v298 = vadd.f32 0.0, %v297
    %v299 = vpop.f32.mrf.mxu0
    %300 = vmatprep.mubr.bf16.mxu0 0
    %301 = vmatmul.mubr.bf16.gmra.mxu0 %v247
    %v302 = vpop.f32.mrf.mxu0
    %v303 = vadd.f32 0.0, %v302
    %v304 = vpop.f32.mrf.mxu0
    %v305 = vpop.f32.mrf.mxu0
    %v306 = vadd.f32 0.0, %v305
    %v307 = vpop.f32.mrf.mxu0
    %308 = vmatprep.mubr.bf16.mxu0 0
    %309 = vmatmul.mubr.bf16.gmra.mxu0 %v250
    %v310 = vpop.f32.mrf.mxu0
    %v311 = vadd.f32 0.0, %v310
    %v312 = vpop.f32.mrf.mxu0
    %v313 = vpop.f32.mrf.mxu0
    %v314 = vadd.f32 0.0, %v313
    %v315 = vpop.f32.mrf.mxu0
    %316 = vdwg.mxu0
    %318 = vset.pattern.permute.xlu0 0
    %319 = vperm.xlu0 %318, %v146
    %v320 = vpop.permute.xlu0 %319
    %323 = vset.pattern.permute.xlu0 0
    %324 = vperm.xlu0 %323, %v147
    %v325 = vpop.permute.xlu0 %324
    %328 = vset.pattern.permute.xlu0 0
    %329 = vperm.xlu0 %328, %v148
    %v330 = vpop.permute.xlu0 %329
    %333 = vset.pattern.permute.xlu0 0
    %334 = vperm.xlu0 %333, %v149
    %v335 = vpop.permute.xlu0 %334
    %338 = vset.pattern.permute.xlu0 0
    %339 = vperm.xlu0 %338, %v150
    %v340 = vpop.permute.xlu0 %339
    %343 = vset.pattern.permute.xlu0 0
    %344 = vperm.xlu0 %343, %v151
    %v345 = vpop.permute.xlu0 %344
    %348 = vset.pattern.permute.xlu0 0
    %349 = vperm.xlu0 %348, %v152
    %v350 = vpop.permute.xlu0 %349
    %353 = vset.pattern.permute.xlu0 0
    %354 = vperm.xlu0 %353, %v153
    %v355 = vpop.permute.xlu0 %354
    %v357 = vmul.f32 %v287, %v320
    %v358 = vmul.f32 %v290, %v325
    %v359 = vmul.f32 %v295, %v330
    %v360 = vmul.f32 %v298, %v335
    %v361 = vmul.f32 %v303, %v340
    %v362 = vmul.f32 %v306, %v345
    %v363 = vmul.f32 %v311, %v350
    %v364 = vmul.f32 %v314, %v355
    %v365 = vpack.c.bf16 %v358, %v357
    %v366 = vpack.c.bf16 %v360, %v359
    %v367 = vpack.c.bf16 %v362, %v361
    %v368 = vpack.c.bf16 %v364, %v363
    %v385 = vunpack.c.l.b16 %v178
    %v386 = vunpack.c.l.b16 %v179
    %v387 = vunpack.c.l.b16 %v180
    %v388 = vunpack.c.l.b16 %v181
    %v389 = vunpack.c.l.b16 %v182
    %v390 = vunpack.c.l.b16 %v183
    %v391 = vunpack.c.l.b16 %v184
    %v392 = vunpack.c.l.b16 %v185
    %v393 = vunpack.c.l.b16 %v186
    %v394 = vunpack.c.l.b16 %v187
    %v395 = vunpack.c.l.b16 %v188
    %v396 = vunpack.c.l.b16 %v189
    %v397 = vunpack.c.l.b16 %v190
    %v398 = vunpack.c.l.b16 %v191
    %v399 = vunpack.c.l.b16 %v192
    %v400 = vunpack.c.l.b16 %v193
    %v401 = vpack.c.b16 %v386, %v385
    %v402 = vpack.c.b16 %v388, %v387
    %v403 = vpack.c.b16 %v390, %v389
    %v404 = vpack.c.b16 %v392, %v391
    %v405 = vpack.c.b16 %v394, %v393
    %v406 = vpack.c.b16 %v396, %v395
    %v407 = vpack.c.b16 %v398, %v397
    %v408 = vpack.c.b16 %v400, %v399
    %417 = vmatprep.subr.bf16.mxu0 0
    %418 = vmatpush1.bf16.msra.mxu0 %v408
    %419 = vmatprep.subr.bf16.mxu0 0
    %420 = vmatpush1.bf16.msra.mxu0 %v407
    %421 = vmatprep.subr.bf16.mxu0 0
    %422 = vmatpush1.bf16.msra.mxu0 %v406
    %423 = vmatprep.subr.bf16.mxu0 0
    %424 = vmatpush1.bf16.msra.mxu0 %v405
    %425 = vmatprep.subr.bf16.mxu0 0
    %426 = vmatpush1.bf16.msra.mxu0 %v404
    %427 = vmatprep.subr.bf16.mxu0 0
    %428 = vmatpush1.bf16.msra.mxu0 %v403
    %429 = vmatprep.subr.bf16.mxu0 0
    %430 = vmatpush1.bf16.msra.mxu0 %v402
    %431 = vmatprep.subr.bf16.mxu0 0
    %432 = vmatpush1.bf16.msra.mxu0 %v401
    %433 = vmatprep.subr.bf16.mxu0 0
    %434 = vmatpush2.bf16.msra.mxu0 0
    %435 = vmatprep.subr.bf16.mxu0 0
    %436 = vmatpush2.bf16.msra.mxu0 0
    %437 = vmatprep.subr.bf16.mxu0 0
    %438 = vmatpush2.bf16.msra.mxu0 0
    %439 = vmatprep.subr.bf16.mxu0 0
    %440 = vmatpush2.bf16.msra.mxu0 0
    %441 = vmatprep.subr.bf16.mxu0 0
    %442 = vmatpush2.bf16.msra.mxu0 0
    %443 = vmatprep.subr.bf16.mxu0 0
    %444 = vmatpush2.bf16.msra.mxu0 0
    %445 = vmatprep.subr.bf16.mxu0 0
    %446 = vmatpush2.bf16.msra.mxu0 0
    %447 = vmatprep.subr.bf16.mxu0 0
    %448 = vmatpush2.bf16.msra.mxu0 0
    %449 = vmatprep.mubr.bf16.mxu0 0
    %450 = vmatmul.mubr.bf16.gmra.mxu0 %v365
    %v451 = vpop.f32.mrf.mxu0
    %v452 = vadd.f32 0.0, %v451
    %v453 = vpop.f32.mrf.mxu0
    %v454 = vpop.f32.mrf.mxu0
    %v455 = vadd.f32 0.0, %v454
    %v456 = vpop.f32.mrf.mxu0
    %457 = vmatprep.mubr.bf16.mxu0 0
    %458 = vmatmul.mubr.bf16.gmra.mxu0 %v366
    %v459 = vpop.f32.mrf.mxu0
    %v460 = vadd.f32 0.0, %v459
    %v461 = vpop.f32.mrf.mxu0
    %v462 = vpop.f32.mrf.mxu0
    %v463 = vadd.f32 0.0, %v462
    %v464 = vpop.f32.mrf.mxu0
    %465 = vmatprep.mubr.bf16.mxu0 0
    %466 = vmatmul.mubr.bf16.gmra.mxu0 %v367
    %v467 = vpop.f32.mrf.mxu0
    %v468 = vadd.f32 0.0, %v467
    %v469 = vpop.f32.mrf.mxu0
    %v470 = vpop.f32.mrf.mxu0
    %v471 = vadd.f32 0.0, %v470
    %v472 = vpop.f32.mrf.mxu0
    %473 = vmatprep.mubr.bf16.mxu0 0
    %474 = vmatmul.mubr.bf16.gmra.mxu0 %v368
    %v475 = vpop.f32.mrf.mxu0
    %v476 = vadd.f32 0.0, %v475
    %v477 = vpop.f32.mrf.mxu0
    %v478 = vpop.f32.mrf.mxu0
    %v479 = vadd.f32 0.0, %v478
    %v480 = vpop.f32.mrf.mxu0
    %481 = vdwg.mxu0
    %v498 = vunpack.c.l.b16 %v162
    %v499 = vunpack.c.l.b16 %v163
    %v500 = vunpack.c.l.b16 %v164
    %v501 = vunpack.c.l.b16 %v165
    %v502 = vunpack.c.l.b16 %v166
    %v503 = vunpack.c.l.b16 %v167
    %v504 = vunpack.c.l.b16 %v168
    %v505 = vunpack.c.l.b16 %v169
    %v506 = vunpack.c.l.b16 %v170
    %v507 = vunpack.c.l.b16 %v171
    %v508 = vunpack.c.l.b16 %v172
    %v509 = vunpack.c.l.b16 %v173
    %v510 = vunpack.c.l.b16 %v174
    %v511 = vunpack.c.l.b16 %v175
    %v512 = vunpack.c.l.b16 %v176
    %v513 = vunpack.c.l.b16 %v177
    %v514 = vpack.c.b16 %v499, %v498
    %v515 = vpack.c.b16 %v501, %v500
    %v516 = vpack.c.b16 %v503, %v502
    %v517 = vpack.c.b16 %v505, %v504
    %v518 = vpack.c.b16 %v507, %v506
    %v519 = vpack.c.b16 %v509, %v508
    %v520 = vpack.c.b16 %v511, %v510
    %v521 = vpack.c.b16 %v513, %v512
    %530 = vmatprep.subr.bf16.mxu0 0
    %531 = vmatpush1.bf16.msra.mxu0 %v521
    %532 = vmatprep.subr.bf16.mxu0 0
    %533 = vmatpush1.bf16.msra.mxu0 %v520
    %534 = vmatprep.subr.bf16.mxu0 0
    %535 = vmatpush1.bf16.msra.mxu0 %v519
    %536 = vmatprep.subr.bf16.mxu0 0
    %537 = vmatpush1.bf16.msra.mxu0 %v518
    %538 = vmatprep.subr.bf16.mxu0 0
    %539 = vmatpush1.bf16.msra.mxu0 %v517
    %540 = vmatprep.subr.bf16.mxu0 0
    %541 = vmatpush1.bf16.msra.mxu0 %v516
    %542 = vmatprep.subr.bf16.mxu0 0
    %543 = vmatpush1.bf16.msra.mxu0 %v515
    %544 = vmatprep.subr.bf16.mxu0 0
    %545 = vmatpush1.bf16.msra.mxu0 %v514
    %546 = vmatprep.subr.bf16.mxu0 0
    %547 = vmatpush2.bf16.msra.mxu0 0
    %548 = vmatprep.subr.bf16.mxu0 0
    %549 = vmatpush2.bf16.msra.mxu0 0
    %550 = vmatprep.subr.bf16.mxu0 0
    %551 = vmatpush2.bf16.msra.mxu0 0
    %552 = vmatprep.subr.bf16.mxu0 0
    %553 = vmatpush2.bf16.msra.mxu0 0
    %554 = vmatprep.subr.bf16.mxu0 0
    %555 = vmatpush2.bf16.msra.mxu0 0
    %556 = vmatprep.subr.bf16.mxu0 0
    %557 = vmatpush2.bf16.msra.mxu0 0
    %558 = vmatprep.subr.bf16.mxu0 0
    %559 = vmatpush2.bf16.msra.mxu0 0
    %560 = vmatprep.subr.bf16.mxu0 0
    %561 = vmatpush2.bf16.msra.mxu0 0
    %562 = vmatprep.mubr.bf16.mxu0 0
    %563 = vmatmul.mubr.bf16.gmra.mxu0 %v231
    %v564 = vpop.f32.mrf.mxu0
    %v565 = vadd.f32 %v452, %v564
    %v566 = vpop.f32.mrf.mxu0
    %v567 = vpop.f32.mrf.mxu0
    %v568 = vadd.f32 %v455, %v567
    %v569 = vpop.f32.mrf.mxu0
    %570 = vmatprep.mubr.bf16.mxu0 0
    %571 = vmatmul.mubr.bf16.gmra.mxu0 %v232
    %v572 = vpop.f32.mrf.mxu0
    %v573 = vadd.f32 %v460, %v572
    %v574 = vpop.f32.mrf.mxu0
    %v575 = vpop.f32.mrf.mxu0
    %v576 = vadd.f32 %v463, %v575
    %v577 = vpop.f32.mrf.mxu0
    %578 = vmatprep.mubr.bf16.mxu0 0
    %579 = vmatmul.mubr.bf16.gmra.mxu0 %v233
    %v580 = vpop.f32.mrf.mxu0
    %v581 = vadd.f32 %v468, %v580
    %v582 = vpop.f32.mrf.mxu0
    %v583 = vpop.f32.mrf.mxu0
    %v584 = vadd.f32 %v471, %v583
    %v585 = vpop.f32.mrf.mxu0
    %586 = vmatprep.mubr.bf16.mxu0 0
    %587 = vmatmul.mubr.bf16.gmra.mxu0 %v234
    %v588 = vpop.f32.mrf.mxu0
    %v589 = vadd.f32 %v476, %v588
    %v590 = vpop.f32.mrf.mxu0
    %v591 = vpop.f32.mrf.mxu0
    %v592 = vadd.f32 %v479, %v591
    %v593 = vpop.f32.mrf.mxu0
    %594 = vdwg.mxu0
    %v596 = vlaneseq
    %v597 = vshrl.u32 %v596, 7
    %v598 = vsub.s32 0, %v597
    %v599 = vrot.slane %v194, %v598
    %v601 = vadd.f32 %v565, %v599
    %v602 = vadd.f32 %v568, %v599
    %v603 = vadd.f32 %v573, %v599
    %v604 = vadd.f32 %v576, %v599
    %v605 = vadd.f32 %v581, %v599
    %v606 = vadd.f32 %v584, %v599
    %v607 = vadd.f32 %v589, %v599
    %v608 = vadd.f32 %v592, %v599
    %v609 = vmax.f32 %v601, 0.0
    %v610 = vmax.f32 %v602, 0.0
    %v611 = vmax.f32 %v603, 0.0
    %v612 = vmax.f32 %v604, 0.0
    %v613 = vmax.f32 %v605, 0.0
    %v614 = vmax.f32 %v606, 0.0
    %v615 = vmax.f32 %v607, 0.0
    %v616 = vmax.f32 %v608, 0.0
    %v617 = vpack.c.bf16 %v610, %v609
    %v618 = vpack.c.bf16 %v612, %v611
    %v619 = vpack.c.bf16 %v614, %v613
    %v620 = vpack.c.bf16 %v616, %v615
    %v621 = vld [vmem:[#allocation8] sm:$0xf]
    %v622 = vld [vmem:[#allocation8 + $0x4] sm:$0xf]
    %v623 = vld [vmem:[#allocation8 + $0x8] sm:$0xf]
    %v624 = vld [vmem:[#allocation8 + $0xc] sm:$0xf]
    %v625 = vld [vmem:[#allocation8 + $0x10] sm:$0xf]
    %v626 = vld [vmem:[#allocation8 + $0x14] sm:$0xf]
    %v627 = vld [vmem:[#allocation8 + $0x18] sm:$0xf]
    %v628 = vld [vmem:[#allocation8 + $0x1c] sm:$0xf]
    %v629 = vld [vmem:[#allocation8 + $0x20] sm:$0xf]
    %v630 = vld [vmem:[#allocation8 + $0x24] sm:$0xf]
    %v631 = vld [vmem:[#allocation8 + $0x28] sm:$0xf]
    %v632 = vld [vmem:[#allocation8 + $0x2c] sm:$0xf]
    %v633 = vld [vmem:[#allocation8 + $0x30] sm:$0xf]
    %v634 = vld [vmem:[#allocation8 + $0x34] sm:$0xf]
    %v635 = vld [vmem:[#allocation8 + $0x38] sm:$0xf]
    %v636 = vld [vmem:[#allocation8 + $0x3c] sm:$0xf]
    %v637 = vld [vmem:[#allocation10] sm:$0xf]
    %v638 = vld [vmem:[#allocation10 + $0x4] sm:$0xf]
    %v639 = vld [vmem:[#allocation10 + $0x8] sm:$0xf]
    %v640 = vld [vmem:[#allocation10 + $0xc] sm:$0xf]
    %v641 = vld [vmem:[#allocation10 + $0x10] sm:$0xf]
    %v642 = vld [vmem:[#allocation10 + $0x14] sm:$0xf]
    %v643 = vld [vmem:[#allocation10 + $0x18] sm:$0xf]
    %v644 = vld [vmem:[#allocation10 + $0x1c] sm:$0xf]
    %v645 = vld [vmem:[#allocation10 + $0x20] sm:$0xf]
    %v646 = vld [vmem:[#allocation10 + $0x24] sm:$0xf]
    %v647 = vld [vmem:[#allocation10 + $0x28] sm:$0xf]
    %v648 = vld [vmem:[#allocation10 + $0x2c] sm:$0xf]
    %v649 = vld [vmem:[#allocation10 + $0x30] sm:$0xf]
    %v650 = vld [vmem:[#allocation10 + $0x34] sm:$0xf]
    %v651 = vld [vmem:[#allocation10 + $0x38] sm:$0xf]
    %v652 = vld [vmem:[#allocation10 + $0x3c] sm:$0xf]
    %v653 = vld [vmem:[%s8] sm:$0x1]
    %654 = vmatprep.subr.bf16.mxu0 0
    %655 = vmatpush1.bf16.msra.mxu0 0
    %656 = vmatprep.subr.bf16.mxu0 0
    %657 = vmatpush1.bf16.msra.mxu0 0
    %658 = vmatprep.subr.bf16.mxu0 0
    %659 = vmatpush1.bf16.msra.mxu0 0
    %660 = vmatprep.subr.bf16.mxu0 0
    %661 = vmatpush1.bf16.msra.mxu0 0
    %662 = vmatprep.subr.bf16.mxu0 0
    %663 = vmatpush1.bf16.msra.mxu0 %v620
    %664 = vmatprep.subr.bf16.mxu0 0
    %665 = vmatpush1.bf16.msra.mxu0 %v619
    %666 = vmatprep.subr.bf16.mxu0 0
    %667 = vmatpush1.bf16.msra.mxu0 %v618
    %668 = vmatprep.subr.bf16.mxu0 0
    %669 = vmatpush1.bf16.msra.mxu0 %v617
    %670 = vmatprep.subr.bf16.mxu0 0
    %671 = vmatpush2.bf16.msra.mxu0 0
    %672 = vmatprep.subr.bf16.mxu0 0
    %673 = vmatpush2.bf16.msra.mxu0 0
    %674 = vmatprep.subr.bf16.mxu0 0
    %675 = vmatpush2.bf16.msra.mxu0 0
    %676 = vmatprep.subr.bf16.mxu0 0
    %677 = vmatpush2.bf16.msra.mxu0 0
    %678 = vmatprep.subr.bf16.mxu0 0
    %679 = vmatpush2.bf16.msra.mxu0 0
    %680 = vmatprep.subr.bf16.mxu0 0
    %681 = vmatpush2.bf16.msra.mxu0 0
    %682 = vmatprep.subr.bf16.mxu0 0
    %683 = vmatpush2.bf16.msra.mxu0 0
    %684 = vmatprep.subr.bf16.mxu0 0
    %685 = vmatpush2.bf16.msra.mxu0 0
    %686 = vmatprep.mubr.bf16.mxu0 0
    %687 = vmatmul.mubr.bf16.gmra.mxu0 %v241
    %v688 = vpop.f32.mrf.mxu0
    %v689 = vadd.f32 0.0, %v688
    %v690 = vpop.f32.mrf.mxu0
    %v691 = vpop.f32.mrf.mxu0
    %v692 = vadd.f32 0.0, %v691
    %v693 = vpop.f32.mrf.mxu0
    %694 = vmatprep.mubr.bf16.mxu0 0
    %695 = vmatmul.mubr.bf16.gmra.mxu0 %v244
    %v696 = vpop.f32.mrf.mxu0
    %v697 = vadd.f32 0.0, %v696
    %v698 = vpop.f32.mrf.mxu0
    %v699 = vpop.f32.mrf.mxu0
    %v700 = vadd.f32 0.0, %v699
    %v701 = vpop.f32.mrf.mxu0
    %702 = vmatprep.mubr.bf16.mxu0 0
    %703 = vmatmul.mubr.bf16.gmra.mxu0 %v247
    %v704 = vpop.f32.mrf.mxu0
    %v705 = vadd.f32 0.0, %v704
    %v706 = vpop.f32.mrf.mxu0
    %v707 = vpop.f32.mrf.mxu0
    %v708 = vadd.f32 0.0, %v707
    %v709 = vpop.f32.mrf.mxu0
    %710 = vmatprep.mubr.bf16.mxu0 0
    %711 = vmatmul.mubr.bf16.gmra.mxu0 %v250
    %v712 = vpop.f32.mrf.mxu0
    %v713 = vadd.f32 0.0, %v712
    %v714 = vpop.f32.mrf.mxu0
    %v715 = vpop.f32.mrf.mxu0
    %v716 = vadd.f32 0.0, %v715
    %v717 = vpop.f32.mrf.mxu0
    %718 = vdwg.mxu0
    %v719 = vmul.f32 %v689, %v320
    %v720 = vmul.f32 %v692, %v325
    %v721 = vmul.f32 %v697, %v330
    %v722 = vmul.f32 %v700, %v335
    %v723 = vmul.f32 %v705, %v340
    %v724 = vmul.f32 %v708, %v345
    %v725 = vmul.f32 %v713, %v350
    %v726 = vmul.f32 %v716, %v355
    %v727 = vpack.c.bf16 %v720, %v719
    %v728 = vpack.c.bf16 %v722, %v721
    %v729 = vpack.c.bf16 %v724, %v723
    %v730 = vpack.c.bf16 %v726, %v725
    %v747 = vunpack.c.l.b16 %v637
    %v748 = vunpack.c.l.b16 %v638
    %v749 = vunpack.c.l.b16 %v639
    %v750 = vunpack.c.l.b16 %v640
    %v751 = vunpack.c.l.b16 %v641
    %v752 = vunpack.c.l.b16 %v642
    %v753 = vunpack.c.l.b16 %v643
    %v754 = vunpack.c.l.b16 %v644
    %v755 = vunpack.c.l.b16 %v645
    %v756 = vunpack.c.l.b16 %v646
    %v757 = vunpack.c.l.b16 %v647
    %v758 = vunpack.c.l.b16 %v648
    %v759 = vunpack.c.l.b16 %v649
    %v760 = vunpack.c.l.b16 %v650
    %v761 = vunpack.c.l.b16 %v651
    %v762 = vunpack.c.l.b16 %v652
    %v763 = vpack.c.b16 %v748, %v747
    %v764 = vpack.c.b16 %v750, %v749
    %v765 = vpack.c.b16 %v752, %v751
    %v766 = vpack.c.b16 %v754, %v753
    %v767 = vpack.c.b16 %v756, %v755
    %v768 = vpack.c.b16 %v758, %v757
    %v769 = vpack.c.b16 %v760, %v759
    %v770 = vpack.c.b16 %v762, %v761
    %779 = vmatprep.subr.bf16.mxu0 0
    %780 = vmatpush1.bf16.msra.mxu0 %v770
    %781 = vmatprep.subr.bf16.mxu0 0
    %782 = vmatpush1.bf16.msra.mxu0 %v769
    %783 = vmatprep.subr.bf16.mxu0 0
    %784 = vmatpush1.bf16.msra.mxu0 %v768
    %785 = vmatprep.subr.bf16.mxu0 0
    %786 = vmatpush1.bf16.msra.mxu0 %v767
    %787 = vmatprep.subr.bf16.mxu0 0
    %788 = vmatpush1.bf16.msra.mxu0 %v766
    %789 = vmatprep.subr.bf16.mxu0 0
    %790 = vmatpush1.bf16.msra.mxu0 %v765
    %791 = vmatprep.subr.bf16.mxu0 0
    %792 = vmatpush1.bf16.msra.mxu0 %v764
    %793 = vmatprep.subr.bf16.mxu0 0
    %794 = vmatpush1.bf16.msra.mxu0 %v763
    %795 = vmatprep.subr.bf16.mxu0 0
    %796 = vmatpush2.bf16.msra.mxu0 0
    %797 = vmatprep.subr.bf16.mxu0 0
    %798 = vmatpush2.bf16.msra.mxu0 0
    %799 = vmatprep.subr.bf16.mxu0 0
    %800 = vmatpush2.bf16.msra.mxu0 0
    %801 = vmatprep.subr.bf16.mxu0 0
    %802 = vmatpush2.bf16.msra.mxu0 0
    %803 = vmatprep.subr.bf16.mxu0 0
    %804 = vmatpush2.bf16.msra.mxu0 0
    %805 = vmatprep.subr.bf16.mxu0 0
    %806 = vmatpush2.bf16.msra.mxu0 0
    %807 = vmatprep.subr.bf16.mxu0 0
    %808 = vmatpush2.bf16.msra.mxu0 0
    %809 = vmatprep.subr.bf16.mxu0 0
    %810 = vmatpush2.bf16.msra.mxu0 0
    %811 = vmatprep.mubr.bf16.mxu0 0
    %812 = vmatmul.mubr.bf16.gmra.mxu0 %v727
    %v813 = vpop.f32.mrf.mxu0
    %v814 = vadd.f32 0.0, %v813
    %v815 = vpop.f32.mrf.mxu0
    %v816 = vpop.f32.mrf.mxu0
    %v817 = vadd.f32 0.0, %v816
    %v818 = vpop.f32.mrf.mxu0
    %819 = vmatprep.mubr.bf16.mxu0 0
    %820 = vmatmul.mubr.bf16.gmra.mxu0 %v728
    %v821 = vpop.f32.mrf.mxu0
    %v822 = vadd.f32 0.0, %v821
    %v823 = vpop.f32.mrf.mxu0
    %v824 = vpop.f32.mrf.mxu0
    %v825 = vadd.f32 0.0, %v824
    %v826 = vpop.f32.mrf.mxu0
    %827 = vmatprep.mubr.bf16.mxu0 0
    %828 = vmatmul.mubr.bf16.gmra.mxu0 %v729
    %v829 = vpop.f32.mrf.mxu0
    %v830 = vadd.f32 0.0, %v829
    %v831 = vpop.f32.mrf.mxu0
    %v832 = vpop.f32.mrf.mxu0
    %v833 = vadd.f32 0.0, %v832
    %v834 = vpop.f32.mrf.mxu0
    %835 = vmatprep.mubr.bf16.mxu0 0
    %836 = vmatmul.mubr.bf16.gmra.mxu0 %v730
    %v837 = vpop.f32.mrf.mxu0
    %v838 = vadd.f32 0.0, %v837
    %v839 = vpop.f32.mrf.mxu0
    %v840 = vpop.f32.mrf.mxu0
    %v841 = vadd.f32 0.0, %v840
    %v842 = vpop.f32.mrf.mxu0
    %843 = vdwg.mxu0
    %v860 = vunpack.c.l.b16 %v621
    %v861 = vunpack.c.l.b16 %v622
    %v862 = vunpack.c.l.b16 %v623
    %v863 = vunpack.c.l.b16 %v624
    %v864 = vunpack.c.l.b16 %v625
    %v865 = vunpack.c.l.b16 %v626
    %v866 = vunpack.c.l.b16 %v627
    %v867 = vunpack.c.l.b16 %v628
    %v868 = vunpack.c.l.b16 %v629
    %v869 = vunpack.c.l.b16 %v630
    %v870 = vunpack.c.l.b16 %v631
    %v871 = vunpack.c.l.b16 %v632
    %v872 = vunpack.c.l.b16 %v633
    %v873 = vunpack.c.l.b16 %v634
    %v874 = vunpack.c.l.b16 %v635
    %v875 = vunpack.c.l.b16 %v636
    %v876 = vpack.c.b16 %v861, %v860
    %v877 = vpack.c.b16 %v863, %v862
    %v878 = vpack.c.b16 %v865, %v864
    %v879 = vpack.c.b16 %v867, %v866
    %v880 = vpack.c.b16 %v869, %v868
    %v881 = vpack.c.b16 %v871, %v870
    %v882 = vpack.c.b16 %v873, %v872
    %v883 = vpack.c.b16 %v875, %v874
    %892 = vmatprep.subr.bf16.mxu0 0
    %893 = vmatpush1.bf16.msra.mxu0 %v883
    %894 = vmatprep.subr.bf16.mxu0 0
    %895 = vmatpush1.bf16.msra.mxu0 %v882
    %896 = vmatprep.subr.bf16.mxu0 0
    %897 = vmatpush1.bf16.msra.mxu0 %v881
    %898 = vmatprep.subr.bf16.mxu0 0
    %899 = vmatpush1.bf16.msra.mxu0 %v880
    %900 = vmatprep.subr.bf16.mxu0 0
    %901 = vmatpush1.bf16.msra.mxu0 %v879
    %902 = vmatprep.subr.bf16.mxu0 0
    %903 = vmatpush1.bf16.msra.mxu0 %v878
    %904 = vmatprep.subr.bf16.mxu0 0
    %905 = vmatpush1.bf16.msra.mxu0 %v877
    %906 = vmatprep.subr.bf16.mxu0 0
    %907 = vmatpush1.bf16.msra.mxu0 %v876
    %908 = vmatprep.subr.bf16.mxu0 0
    %909 = vmatpush2.bf16.msra.mxu0 0
    %910 = vmatprep.subr.bf16.mxu0 0
    %911 = vmatpush2.bf16.msra.mxu0 0
    %912 = vmatprep.subr.bf16.mxu0 0
    %913 = vmatpush2.bf16.msra.mxu0 0
    %914 = vmatprep.subr.bf16.mxu0 0
    %915 = vmatpush2.bf16.msra.mxu0 0
    %916 = vmatprep.subr.bf16.mxu0 0
    %917 = vmatpush2.bf16.msra.mxu0 0
    %918 = vmatprep.subr.bf16.mxu0 0
    %919 = vmatpush2.bf16.msra.mxu0 0
    %920 = vmatprep.subr.bf16.mxu0 0
    %921 = vmatpush2.bf16.msra.mxu0 0
    %922 = vmatprep.subr.bf16.mxu0 0
    %923 = vmatpush2.bf16.msra.mxu0 0
    %924 = vmatprep.mubr.bf16.mxu0 0
    %925 = vmatmul.mubr.bf16.gmra.mxu0 %v617
    %v926 = vpop.f32.mrf.mxu0
    %v927 = vadd.f32 %v814, %v926
    %v928 = vpop.f32.mrf.mxu0
    %v929 = vpop.f32.mrf.mxu0
    %v930 = vadd.f32 %v817, %v929
    %v931 = vpop.f32.mrf.mxu0
    %932 = vmatprep.mubr.bf16.mxu0 0
    %933 = vmatmul.mubr.bf16.gmra.mxu0 %v618
    %v934 = vpop.f32.mrf.mxu0
    %v935 = vadd.f32 %v822, %v934
    %v936 = vpop.f32.mrf.mxu0
    %v937 = vpop.f32.mrf.mxu0
    %v938 = vadd.f32 %v825, %v937
    %v939 = vpop.f32.mrf.mxu0
    %940 = vmatprep.mubr.bf16.mxu0 0
    %941 = vmatmul.mubr.bf16.gmra.mxu0 %v619
    %v942 = vpop.f32.mrf.mxu0
    %v943 = vadd.f32 %v830, %v942
    %v944 = vpop.f32.mrf.mxu0
    %v945 = vpop.f32.mrf.mxu0
    %v946 = vadd.f32 %v833, %v945
    %v947 = vpop.f32.mrf.mxu0
    %948 = vmatprep.mubr.bf16.mxu0 0
    %949 = vmatmul.mubr.bf16.gmra.mxu0 %v620
    %v950 = vpop.f32.mrf.mxu0
    %v951 = vadd.f32 %v838, %v950
    %v952 = vpop.f32.mrf.mxu0
    %v953 = vpop.f32.mrf.mxu0
    %v954 = vadd.f32 %v841, %v953
    %v955 = vpop.f32.mrf.mxu0
    %956 = vdwg.mxu0
    %v958 = vlaneseq
    %v959 = vshrl.u32 %v958, 7
    %v960 = vsub.s32 0, %v959
    %v961 = vrot.slane %v653, %v960
    %v963 = vadd.f32 %v927, %v961
    %v964 = vadd.f32 %v930, %v961
    %v965 = vadd.f32 %v935, %v961
    %v966 = vadd.f32 %v938, %v961
    %v967 = vadd.f32 %v943, %v961
    %v968 = vadd.f32 %v946, %v961
    %v969 = vadd.f32 %v951, %v961
    %v970 = vadd.f32 %v954, %v961
    %v971 = vmax.f32 %v963, 0.0
    %v972 = vmax.f32 %v964, 0.0
    %v973 = vmax.f32 %v965, 0.0
    %v974 = vmax.f32 %v966, 0.0
    %v975 = vmax.f32 %v967, 0.0
    %v976 = vmax.f32 %v968, 0.0
    %v977 = vmax.f32 %v969, 0.0
    %v978 = vmax.f32 %v970, 0.0
    %v979 = vpack.c.bf16 %v972, %v971
    %v980 = vpack.c.bf16 %v974, %v973
    %v981 = vpack.c.bf16 %v976, %v975
    %v982 = vpack.c.bf16 %v978, %v977
    %v983 = vld [vmem:[#allocation11] sm:$0xf]
    %v984 = vld [vmem:[#allocation11 + $0x4] sm:$0xf]
    %v985 = vld [vmem:[#allocation11 + $0x8] sm:$0xf]
    %v986 = vld [vmem:[#allocation11 + $0xc] sm:$0xf]
    %v987 = vld [vmem:[#allocation11 + $0x10] sm:$0xf]
    %v988 = vld [vmem:[#allocation11 + $0x14] sm:$0xf]
    %v989 = vld [vmem:[#allocation11 + $0x18] sm:$0xf]
    %v990 = vld [vmem:[#allocation11 + $0x1c] sm:$0xf]
    %v991 = vld [vmem:[#allocation11 + $0x20] sm:$0xf]
    %v992 = vld [vmem:[#allocation11 + $0x24] sm:$0xf]
    %v993 = vld [vmem:[#allocation11 + $0x28] sm:$0xf]
    %v994 = vld [vmem:[#allocation11 + $0x2c] sm:$0xf]
    %v995 = vld [vmem:[#allocation11 + $0x30] sm:$0xf]
    %v996 = vld [vmem:[#allocation11 + $0x34] sm:$0xf]
    %v997 = vld [vmem:[#allocation11 + $0x38] sm:$0xf]
    %v998 = vld [vmem:[#allocation11 + $0x3c] sm:$0xf]
    %v999 = vld [vmem:[#allocation13] sm:$0xf]
    %v1000 = vld [vmem:[#allocation13 + $0x4] sm:$0xf]
    %v1001 = vld [vmem:[#allocation13 + $0x8] sm:$0xf]
    %v1002 = vld [vmem:[#allocation13 + $0xc] sm:$0xf]
    %v1003 = vld [vmem:[#allocation13 + $0x10] sm:$0xf]
    %v1004 = vld [vmem:[#allocation13 + $0x14] sm:$0xf]
    %v1005 = vld [vmem:[#allocation13 + $0x18] sm:$0xf]
    %v1006 = vld [vmem:[#allocation13 + $0x1c] sm:$0xf]
    %v1007 = vld [vmem:[#allocation13 + $0x20] sm:$0xf]
    %v1008 = vld [vmem:[#allocation13 + $0x24] sm:$0xf]
    %v1009 = vld [vmem:[#allocation13 + $0x28] sm:$0xf]
    %v1010 = vld [vmem:[#allocation13 + $0x2c] sm:$0xf]
    %v1011 = vld [vmem:[#allocation13 + $0x30] sm:$0xf]
    %v1012 = vld [vmem:[#allocation13 + $0x34] sm:$0xf]
    %v1013 = vld [vmem:[#allocation13 + $0x38] sm:$0xf]
    %v1014 = vld [vmem:[#allocation13 + $0x3c] sm:$0xf]
    %v1015 = vld [vmem:[%s11] sm:$0x1]
    %1016 = vmatprep.subr.bf16.mxu0 0
    %1017 = vmatpush1.bf16.msra.mxu0 0
    %1018 = vmatprep.subr.bf16.mxu0 0
    %1019 = vmatpush1.bf16.msra.mxu0 0
    %1020 = vmatprep.subr.bf16.mxu0 0
    %1021 = vmatpush1.bf16.msra.mxu0 0
    %1022 = vmatprep.subr.bf16.mxu0 0
    %1023 = vmatpush1.bf16.msra.mxu0 0
    %1024 = vmatprep.subr.bf16.mxu0 0
    %1025 = vmatpush1.bf16.msra.mxu0 %v982
    %1026 = vmatprep.subr.bf16.mxu0 0
    %1027 = vmatpush1.bf16.msra.mxu0 %v981
    %1028 = vmatprep.subr.bf16.mxu0 0
    %1029 = vmatpush1.bf16.msra.mxu0 %v980
    %1030 = vmatprep.subr.bf16.mxu0 0
    %1031 = vmatpush1.bf16.msra.mxu0 %v979
    %1032 = vmatprep.subr.bf16.mxu0 0
    %1033 = vmatpush2.bf16.msra.mxu0 0
    %1034 = vmatprep.subr.bf16.mxu0 0
    %1035 = vmatpush2.bf16.msra.mxu0 0
    %1036 = vmatprep.subr.bf16.mxu0 0
    %1037 = vmatpush2.bf16.msra.mxu0 0
    %1038 = vmatprep.subr.bf16.mxu0 0
    %1039 = vmatpush2.bf16.msra.mxu0 0
    %1040 = vmatprep.subr.bf16.mxu0 0
    %1041 = vmatpush2.bf16.msra.mxu0 0
    %1042 = vmatprep.subr.bf16.mxu0 0
    %1043 = vmatpush2.bf16.msra.mxu0 0
    %1044 = vmatprep.subr.bf16.mxu0 0
    %1045 = vmatpush2.bf16.msra.mxu0 0
    %1046 = vmatprep.subr.bf16.mxu0 0
    %1047 = vmatpush2.bf16.msra.mxu0 0
    %1048 = vmatprep.mubr.bf16.mxu0 0
    %1049 = vmatmul.mubr.bf16.gmra.mxu0 %v241
    %v1050 = vpop.f32.mrf.mxu0
    %v1051 = vadd.f32 0.0, %v1050
    %v1052 = vpop.f32.mrf.mxu0
    %v1053 = vpop.f32.mrf.mxu0
    %v1054 = vadd.f32 0.0, %v1053
    %v1055 = vpop.f32.mrf.mxu0
    %1056 = vmatprep.mubr.bf16.mxu0 0
    %1057 = vmatmul.mubr.bf16.gmra.mxu0 %v244
    %v1058 = vpop.f32.mrf.mxu0
    %v1059 = vadd.f32 0.0, %v1058
    %v1060 = vpop.f32.mrf.mxu0
    %v1061 = vpop.f32.mrf.mxu0
    %v1062 = vadd.f32 0.0, %v1061
    %v1063 = vpop.f32.mrf.mxu0
    %1064 = vmatprep.mubr.bf16.mxu0 0
    %1065 = vmatmul.mubr.bf16.gmra.mxu0 %v247
    %v1066 = vpop.f32.mrf.mxu0
    %v1067 = vadd.f32 0.0, %v1066
    %v1068 = vpop.f32.mrf.mxu0
    %v1069 = vpop.f32.mrf.mxu0
    %v1070 = vadd.f32 0.0, %v1069
    %v1071 = vpop.f32.mrf.mxu0
    %1072 = vmatprep.mubr.bf16.mxu0 0
    %1073 = vmatmul.mubr.bf16.gmra.mxu0 %v250
    %v1074 = vpop.f32.mrf.mxu0
    %v1075 = vadd.f32 0.0, %v1074
    %v1076 = vpop.f32.mrf.mxu0
    %v1077 = vpop.f32.mrf.mxu0
    %v1078 = vadd.f32 0.0, %v1077
    %v1079 = vpop.f32.mrf.mxu0
    %1080 = vdwg.mxu0
    %v1081 = vmul.f32 %v1051, %v320
    %v1082 = vmul.f32 %v1054, %v325
    %v1083 = vmul.f32 %v1059, %v330
    %v1084 = vmul.f32 %v1062, %v335
    %v1085 = vmul.f32 %v1067, %v340
    %v1086 = vmul.f32 %v1070, %v345
    %v1087 = vmul.f32 %v1075, %v350
    %v1088 = vmul.f32 %v1078, %v355
    %v1089 = vpack.c.bf16 %v1082, %v1081
    %v1090 = vpack.c.bf16 %v1084, %v1083
    %v1091 = vpack.c.bf16 %v1086, %v1085
    %v1092 = vpack.c.bf16 %v1088, %v1087
    %v1109 = vunpack.c.l.b16 %v999
    %v1110 = vunpack.c.l.b16 %v1000
    %v1111 = vunpack.c.l.b16 %v1001
    %v1112 = vunpack.c.l.b16 %v1002
    %v1113 = vunpack.c.l.b16 %v1003
    %v1114 = vunpack.c.l.b16 %v1004
    %v1115 = vunpack.c.l.b16 %v1005
    %v1116 = vunpack.c.l.b16 %v1006
    %v1117 = vunpack.c.l.b16 %v1007
    %v1118 = vunpack.c.l.b16 %v1008
    %v1119 = vunpack.c.l.b16 %v1009
    %v1120 = vunpack.c.l.b16 %v1010
    %v1121 = vunpack.c.l.b16 %v1011
    %v1122 = vunpack.c.l.b16 %v1012
    %v1123 = vunpack.c.l.b16 %v1013
    %v1124 = vunpack.c.l.b16 %v1014
    %v1125 = vpack.c.b16 %v1110, %v1109
    %v1126 = vpack.c.b16 %v1112, %v1111
    %v1127 = vpack.c.b16 %v1114, %v1113
    %v1128 = vpack.c.b16 %v1116, %v1115
    %v1129 = vpack.c.b16 %v1118, %v1117
    %v1130 = vpack.c.b16 %v1120, %v1119
    %v1131 = vpack.c.b16 %v1122, %v1121
    %v1132 = vpack.c.b16 %v1124, %v1123
    %1141 = vmatprep.subr.bf16.mxu0 0
    %1142 = vmatpush1.bf16.msra.mxu0 %v1132
    %1143 = vmatprep.subr.bf16.mxu0 0
    %1144 = vmatpush1.bf16.msra.mxu0 %v1131
    %1145 = vmatprep.subr.bf16.mxu0 0
    %1146 = vmatpush1.bf16.msra.mxu0 %v1130
    %1147 = vmatprep.subr.bf16.mxu0 0
    %1148 = vmatpush1.bf16.msra.mxu0 %v1129
    %1149 = vmatprep.subr.bf16.mxu0 0
    %1150 = vmatpush1.bf16.msra.mxu0 %v1128
    %1151 = vmatprep.subr.bf16.mxu0 0
    %1152 = vmatpush1.bf16.msra.mxu0 %v1127
    %1153 = vmatprep.subr.bf16.mxu0 0
    %1154 = vmatpush1.bf16.msra.mxu0 %v1126
    %1155 = vmatprep.subr.bf16.mxu0 0
    %1156 = vmatpush1.bf16.msra.mxu0 %v1125
    %1157 = vmatprep.subr.bf16.mxu0 0
    %1158 = vmatpush2.bf16.msra.mxu0 0
    %1159 = vmatprep.subr.bf16.mxu0 0
    %1160 = vmatpush2.bf16.msra.mxu0 0
    %1161 = vmatprep.subr.bf16.mxu0 0
    %1162 = vmatpush2.bf16.msra.mxu0 0
    %1163 = vmatprep.subr.bf16.mxu0 0
    %1164 = vmatpush2.bf16.msra.mxu0 0
    %1165 = vmatprep.subr.bf16.mxu0 0
    %1166 = vmatpush2.bf16.msra.mxu0 0
    %1167 = vmatprep.subr.bf16.mxu0 0
    %1168 = vmatpush2.bf16.msra.mxu0 0
    %1169 = vmatprep.subr.bf16.mxu0 0
    %1170 = vmatpush2.bf16.msra.mxu0 0
    %1171 = vmatprep.subr.bf16.mxu0 0
    %1172 = vmatpush2.bf16.msra.mxu0 0
    %1173 = vmatprep.mubr.bf16.mxu0 0
    %1174 = vmatmul.mubr.bf16.gmra.mxu0 %v1089
    %v1175 = vpop.f32.mrf.mxu0
    %v1176 = vadd.f32 0.0, %v1175
    %v1177 = vpop.f32.mrf.mxu0
    %v1178 = vpop.f32.mrf.mxu0
    %v1179 = vadd.f32 0.0, %v1178
    %v1180 = vpop.f32.mrf.mxu0
    %1181 = vmatprep.mubr.bf16.mxu0 0
    %1182 = vmatmul.mubr.bf16.gmra.mxu0 %v1090
    %v1183 = vpop.f32.mrf.mxu0
    %v1184 = vadd.f32 0.0, %v1183
    %v1185 = vpop.f32.mrf.mxu0
    %v1186 = vpop.f32.mrf.mxu0
    %v1187 = vadd.f32 0.0, %v1186
    %v1188 = vpop.f32.mrf.mxu0
    %1189 = vmatprep.mubr.bf16.mxu0 0
    %1190 = vmatmul.mubr.bf16.gmra.mxu0 %v1091
    %v1191 = vpop.f32.mrf.mxu0
    %v1192 = vadd.f32 0.0, %v1191
    %v1193 = vpop.f32.mrf.mxu0
    %v1194 = vpop.f32.mrf.mxu0
    %v1195 = vadd.f32 0.0, %v1194
    %v1196 = vpop.f32.mrf.mxu0
    %1197 = vmatprep.mubr.bf16.mxu0 0
    %1198 = vmatmul.mubr.bf16.gmra.mxu0 %v1092
    %v1199 = vpop.f32.mrf.mxu0
    %v1200 = vadd.f32 0.0, %v1199
    %v1201 = vpop.f32.mrf.mxu0
    %v1202 = vpop.f32.mrf.mxu0
    %v1203 = vadd.f32 0.0, %v1202
    %v1204 = vpop.f32.mrf.mxu0
    %1205 = vdwg.mxu0
    %v1222 = vunpack.c.l.b16 %v983
    %v1223 = vunpack.c.l.b16 %v984
    %v1224 = vunpack.c.l.b16 %v985
    %v1225 = vunpack.c.l.b16 %v986
    %v1226 = vunpack.c.l.b16 %v987
    %v1227 = vunpack.c.l.b16 %v988
    %v1228 = vunpack.c.l.b16 %v989
    %v1229 = vunpack.c.l.b16 %v990
    %v1230 = vunpack.c.l.b16 %v991
    %v1231 = vunpack.c.l.b16 %v992
    %v1232 = vunpack.c.l.b16 %v993
    %v1233 = vunpack.c.l.b16 %v994
    %v1234 = vunpack.c.l.b16 %v995
    %v1235 = vunpack.c.l.b16 %v996
    %v1236 = vunpack.c.l.b16 %v997
    %v1237 = vunpack.c.l.b16 %v998
    %v1238 = vpack.c.b16 %v1223, %v1222
    %v1239 = vpack.c.b16 %v1225, %v1224
    %v1240 = vpack.c.b16 %v1227, %v1226
    %v1241 = vpack.c.b16 %v1229, %v1228
    %v1242 = vpack.c.b16 %v1231, %v1230
    %v1243 = vpack.c.b16 %v1233, %v1232
    %v1244 = vpack.c.b16 %v1235, %v1234
    %v1245 = vpack.c.b16 %v1237, %v1236
    %1254 = vmatprep.subr.bf16.mxu0 0
    %1255 = vmatpush1.bf16.msra.mxu0 %v1245
    %1256 = vmatprep.subr.bf16.mxu0 0
    %1257 = vmatpush1.bf16.msra.mxu0 %v1244
    %1258 = vmatprep.subr.bf16.mxu0 0
    %1259 = vmatpush1.bf16.msra.mxu0 %v1243
    %1260 = vmatprep.subr.bf16.mxu0 0
    %1261 = vmatpush1.bf16.msra.mxu0 %v1242
    %1262 = vmatprep.subr.bf16.mxu0 0
    %1263 = vmatpush1.bf16.msra.mxu0 %v1241
    %1264 = vmatprep.subr.bf16.mxu0 0
    %1265 = vmatpush1.bf16.msra.mxu0 %v1240
    %1266 = vmatprep.subr.bf16.mxu0 0
    %1267 = vmatpush1.bf16.msra.mxu0 %v1239
    %1268 = vmatprep.subr.bf16.mxu0 0
    %1269 = vmatpush1.bf16.msra.mxu0 %v1238
    %1270 = vmatprep.subr.bf16.mxu0 0
    %1271 = vmatpush2.bf16.msra.mxu0 0
    %1272 = vmatprep.subr.bf16.mxu0 0
    %1273 = vmatpush2.bf16.msra.mxu0 0
    %1274 = vmatprep.subr.bf16.mxu0 0
    %1275 = vmatpush2.bf16.msra.mxu0 0
    %1276 = vmatprep.subr.bf16.mxu0 0
    %1277 = vmatpush2.bf16.msra.mxu0 0
    %1278 = vmatprep.subr.bf16.mxu0 0
    %1279 = vmatpush2.bf16.msra.mxu0 0
    %1280 = vmatprep.subr.bf16.mxu0 0
    %1281 = vmatpush2.bf16.msra.mxu0 0
    %1282 = vmatprep.subr.bf16.mxu0 0
    %1283 = vmatpush2.bf16.msra.mxu0 0
    %1284 = vmatprep.subr.bf16.mxu0 0
    %1285 = vmatpush2.bf16.msra.mxu0 0
    %1286 = vmatprep.mubr.bf16.mxu0 0
    %1287 = vmatmul.mubr.bf16.gmra.mxu0 %v979
    %v1288 = vpop.f32.mrf.mxu0
    %v1289 = vadd.f32 %v1176, %v1288
    %v1290 = vpop.f32.mrf.mxu0
    %v1291 = vpop.f32.mrf.mxu0
    %v1292 = vadd.f32 %v1179, %v1291
    %v1293 = vpop.f32.mrf.mxu0
    %1294 = vmatprep.mubr.bf16.mxu0 0
    %1295 = vmatmul.mubr.bf16.gmra.mxu0 %v980
    %v1296 = vpop.f32.mrf.mxu0
    %v1297 = vadd.f32 %v1184, %v1296
    %v1298 = vpop.f32.mrf.mxu0
    %v1299 = vpop.f32.mrf.mxu0
    %v1300 = vadd.f32 %v1187, %v1299
    %v1301 = vpop.f32.mrf.mxu0
    %1302 = vmatprep.mubr.bf16.mxu0 0
    %1303 = vmatmul.mubr.bf16.gmra.mxu0 %v981
    %v1304 = vpop.f32.mrf.mxu0
    %v1305 = vadd.f32 %v1192, %v1304
    %v1306 = vpop.f32.mrf.mxu0
    %v1307 = vpop.f32.mrf.mxu0
    %v1308 = vadd.f32 %v1195, %v1307
    %v1309 = vpop.f32.mrf.mxu0
    %1310 = vmatprep.mubr.bf16.mxu0 0
    %1311 = vmatmul.mubr.bf16.gmra.mxu0 %v982
    %v1312 = vpop.f32.mrf.mxu0
    %v1313 = vadd.f32 %v1200, %v1312
    %v1314 = vpop.f32.mrf.mxu0
    %v1315 = vpop.f32.mrf.mxu0
    %v1316 = vadd.f32 %v1203, %v1315
    %v1317 = vpop.f32.mrf.mxu0
    %1318 = vdwg.mxu0
    %v1320 = vlaneseq
    %v1321 = vshrl.u32 %v1320, 7
    %v1322 = vsub.s32 0, %v1321
    %v1323 = vrot.slane %v1015, %v1322
    %v1325 = vadd.f32 %v1289, %v1323
    %v1326 = vadd.f32 %v1292, %v1323
    %v1327 = vadd.f32 %v1297, %v1323
    %v1328 = vadd.f32 %v1300, %v1323
    %v1329 = vadd.f32 %v1305, %v1323
    %v1330 = vadd.f32 %v1308, %v1323
    %v1331 = vadd.f32 %v1313, %v1323
    %v1332 = vadd.f32 %v1316, %v1323
    %1333 = vst [vmem:[#allocation14] sm:$0xff] %v1325
    %1334 = vst [vmem:[#allocation14 + $0x8] sm:$0xff] %v1326
    %1335 = vst [vmem:[#allocation14 + $0x10] sm:$0xff] %v1327
    %1336 = vst [vmem:[#allocation14 + $0x18] sm:$0xff] %v1328
    %1337 = vst [vmem:[#allocation14 + $0x20] sm:$0xff] %v1329
    %1338 = vst [vmem:[#allocation14 + $0x28] sm:$0xff] %v1330
    %1339 = vst [vmem:[#allocation14 + $0x30] sm:$0xff] %v1331
    %1340 = vst [vmem:[#allocation14 + $0x38] sm:$0xff] %v1332
    // Predicated region
    $region78: #{tpu_custom_call.1} parent=1 // pred_check
      _
    $region79: #{tpu_custom_call.1} parent=1 // pred_check_branch
      %1342 = sbr.rel (0) target = $region81
    $region80: #{tpu_custom_call.1} parent=1 // pred_region
      %s1344 = ssub.s32 1024, 1024
      %1345 = vsyncadd [#allocation4], %s1344
      %s1346 = sshll.u32 [#allocation14], 4
      %s1347 = int_to_ptr.vmem [resolvable:$true] %s1346
      %1352 = dma.vmem_to_hbm [thread:$0]  %s1347, 1024, %s12, [#allocation4], 128, 128, 8
    $region81: #{tpu_custom_call.1} parent=1 // pred_fallthru
      _
    // Predicated region
    $region82: #{tpu_custom_call.1} parent=1 // pred_check
      _
    $region83: #{tpu_custom_call.1} parent=1 // pred_check_branch
      %1354 = sbr.rel (0) target = $region85
    $region84: #{tpu_custom_call.1} parent=1 // pred_region
      %1355 = dma.done [#allocation4], 1024
    $region85: #{tpu_custom_call.1} parent=1 // pred_fallthru
      _
    %1356 = vsyncpa [#allocation3], 1
    %1357 = vsyncpa [#allocation6], 1
    %1358 = vsyncpa [#allocation9], 1
    %1359 = vsyncpa [#allocation12], 1
    %1360 = vsyncpa [#allocation4], 1

</llo_original>
